<compile_context>
chip_gen: v5e
topology: v5e:2x2
jax: 0.10.0
libtpu: 0.0.40
codegen_flags: <defaults>
</compile_context>

<pallas_src>
import functools

import jax
import jax.numpy as jnp
from jax.experimental import pallas as pl
from jax.experimental.pallas import tpu as pltpu


# ---------------------------------------------------------------------------
# Kernel 1a: resident-weight matmul  o = x @ W^T + b   (grid over rows only)
# ---------------------------------------------------------------------------
def _matmul_bias_resident_kernel(x_ref, w_ref, b_ref, o_ref):
    acc = jnp.dot(x_ref[...], w_ref[...], preferred_element_type=jnp.float32)
    o_ref[...] = (acc + b_ref[...]).astype(o_ref.dtype)


# ---------------------------------------------------------------------------
# Kernel 1b: K-grid fallback (weight too large to keep VMEM-resident)
# ---------------------------------------------------------------------------
def _matmul_bias_kgrid_kernel(x_ref, w_ref, b_ref, o_ref, acc_ref):
    k = pl.program_id(2)

    @pl.when(k == 0)
    def _():
        # Bias folded into the accumulator init (no separate epilogue add).
        acc_ref[...] = jnp.broadcast_to(b_ref[...], acc_ref.shape)

    acc_ref[...] += jnp.dot(x_ref[...], w_ref[...],
                            preferred_element_type=jnp.float32)

    @pl.when(k == pl.num_programs(2) - 1)
    def _():
        o_ref[...] = acc_ref[...].astype(o_ref.dtype)


# ---------------------------------------------------------------------------
# Kernel 2: probe eval + control on the last-token rows, scattered in place
#           into the aliased x_seq buffer (only B rows of HBM are touched).
# ---------------------------------------------------------------------------
def _probe_control_kernel(x_hbm, w_ref, s_ref, xout_hbm, ppre_ref, ppost_ref,
                          rows_buf, sem, *, gamma, thres, newton_iters,
                          row_ids):
    # ---- gather: B last-token rows, HBM -> VMEM (tiny strided gather) ----
    for b, r in enumerate(row_ids):
        pltpu.make_async_copy(x_hbm.at[pl.ds(r, 1), :],
                              rows_buf.at[pl.ds(b, 1), :], sem.at[b]).start()
    for b, r in enumerate(row_ids):
        pltpu.make_async_copy(x_hbm.at[pl.ds(r, 1), :],
                              rows_buf.at[pl.ds(b, 1), :], sem.at[b]).wait()

    x = rows_buf[...].astype(jnp.float32)             # (B, D) last-token rows
    w = w_ref[...]                                    # (1, D)  w = W[0] - W[1]
    a = s_ref[0]                                      # ||w||^2        (SMEM)
    b_diff = s_ref[1]                                 # b[1] - b[0]    (SMEM)

    # c = x_last @ w : shared by toxicity test, Newton solve and both probes.
    c = jnp.sum(x * w, axis=-1, keepdims=True)        # (B, 1)

    # softmax(probe(x), -1)[:, 1] == sigmoid((x@W1+b1)-(x@W0+b0)) == sigmoid(b_diff - c)
    ppre_ref[...] = 1.0 / (1.0 + jnp.exp(c - b_diff))

    # Module: self.thres = -thres ; toxic iff  x @ w < -thres.
    toxic = c < -thres
    c_t = jnp.where(toxic, c, jnp.zeros_like(c))

    # f(l) = l*exp(l*a + c) + l - 1 : increasing & convex on l>=0, root in (0,1).
    # l0 = 1/(1+exp(c)) gives f(l0) >= 0 -> Newton descends monotonically.
    lam = 1.0 / (1.0 + jnp.exp(c_t))

    def newton_step(_, lam):
        e = jnp.exp(jnp.minimum(lam * a + c_t, 60.0))   # clamp: no f32 inf/NaN
        f = lam * e + lam - 1.0
        fp = e * (1.0 + lam * a) + 1.0
        return jnp.clip(lam - f / fp, 1e-8, 1.0)

    lam = jax.lax.fori_loop(0, newton_iters, newton_step, lam, unroll=True)
    lam = jnp.where(toxic, lam, jnp.zeros_like(lam))   # non-toxic rows: theta = 0

    scale = gamma * lam                                # (B, 1)
    x_adj = x + scale * w                              # x_last + theta
    c_adj = c + scale * a                              # x_adj @ w, analytically
    ppost_ref[...] = 1.0 / (1.0 + jnp.exp(c_adj - b_diff))

    # ---- scatter: write only the B adjusted rows back (aliased buffer) ----
    rows_buf[...] = x_adj.astype(rows_buf.dtype)
    for b, r in enumerate(row_ids):
        pltpu.make_async_copy(rows_buf.at[pl.ds(b, 1), :],
                              xout_hbm.at[pl.ds(r, 1), :], sem.at[b]).start()
    for b, r in enumerate(row_ids):
        pltpu.make_async_copy(rows_buf.at[pl.ds(b, 1), :],
                              xout_hbm.at[pl.ds(r, 1), :], sem.at[b]).wait()


# ---------------------------------------------------------------------------
# Shape-static helpers (run at trace time)
# ---------------------------------------------------------------------------
def _vmem_capacity_bytes():
    try:
        return int(pltpu.get_tpu_info().vmem_capacity_bytes)
    except Exception:
        return 64 * 1024 * 1024            # conservative (v7x per-TC VMEM)


def _pick_tm(m, per_row_bytes, avail_bytes):
    """Largest tile height dividing m that fits, preferring >= 2 grid steps so
    v7x's two TensorCores both get work (v5e/v6e are unaffected)."""
    best = None
    for t in (1024, 512, 256, 128, 64, 32, 16, 8):
        if t > m or m % t != 0 or t * per_row_bytes > avail_bytes:
            continue
        if best is None:
            best = t
        if m // t >= 2:
            return t
    return best if best is not None else m


# ---------------------------------------------------------------------------
# One-time parameter preprocessing (hoisted out of the per-call forward)
# ---------------------------------------------------------------------------
def prepare_linear_control_params(base_w, base_b, probe_w, probe_b,
                                  mxu_dtype=jnp.bfloat16):
    """Pre-transpose/cast the base weight and hoist the probe constants."""
    wT = jnp.asarray(base_w).T.astype(mxu_dtype)               # (d_in, d_out)
    bias = jnp.asarray(base_b).reshape(1, -1).astype(jnp.float32)
    w_row = (probe_w[0:1, :] - probe_w[1:2, :]).astype(jnp.float32)  # (1, D)
    a = jnp.sum(w_row * w_row)                                 # ||w||^2
    b_diff = (probe_b[1] - probe_b[0]).astype(jnp.float32)
    scal = jnp.stack([a, b_diff]).astype(jnp.float32)          # SMEM scalars
    return wT, bias, w_row, scal


# ---------------------------------------------------------------------------
# Forward
# ---------------------------------------------------------------------------
def linear_control_forward(x, position_ids, wT, bias, w_row, scal, *,
                           gamma=0.01, thres=0.05, control=True,
                           newton_iters=5, out_dtype=jnp.float32):
    """Returns (x_seq, p_pre, p_post).

    x_seq  : (B, S, D) hidden states after base layer (+ steering if control)
    p_pre  : (B,)      probe toxicity prob before adjustment
    p_post : (B,)      probe toxicity prob after adjustment
    Set out_dtype=jnp.bfloat16 when the downstream layer accepts bf16 hidden
    states (halves the dominant HBM writeback of kernel 1).
    """
    B, S, D = x.shape
    d_in, d_out = wT.shape
    assert d_in == D
    M = B * S
    # Module semantics: last_token_idx = position_ids.size(1) - 1 (static).
    last_idx = int(position_ids.shape[1]) - 1

    x2 = x.reshape(M, d_in).astype(wT.dtype)          # bf16 MXU operand

    # ---- architecture-keyed tile / path selection -------------------------
    cap = _vmem_capacity_bytes()
    vmem_limit = min(int(cap * 0.85), 100 * 1024 * 1024)   # ~100MiB v5e/v6e, ~54MiB v7x
    mxu_bytes = jnp.dtype(wT.dtype).itemsize
    out_bytes = jnp.dtype(out_dtype).itemsize
    weight_bytes = d_in * d_out * mxu_bytes            # Buffered(1): single copy
    bias_bytes = d_out * 4
    per_row = 2 * (d_in * mxu_bytes + d_out * out_bytes)   # dbl-buffered x + out

    resident = weight_bytes + bias_bytes + 8 * per_row <= int(vmem_limit * 0.9)

    if resident:
        tm = _pick_tm(M, per_row,
                      int(vmem_limit * 0.9) - weight_bytes - bias_bytes)
        x_seq_flat = pl.pallas_call(
            _matmul_bias_resident_kernel,
            out_shape=jax.ShapeDtypeStruct((M, d_out), out_dtype),
            grid=(M // tm,),
            in_specs=[
                pl.BlockSpec((tm, d_in), lambda i: (i, 0)),
                pl.BlockSpec((d_in, d_out), lambda i: (0, 0),
                             pipeline_mode=pl.Buffered(buffer_count=1)),
                pl.BlockSpec((1, d_out), lambda i: (0, 0),
                             pipeline_mode=pl.Buffered(buffer_count=1)),
            ],
            out_specs=pl.BlockSpec((tm, d_out), lambda i: (i, 0)),
            compiler_params=pltpu.CompilerParams(
                dimension_semantics=("parallel",),
                vmem_limit_bytes=vmem_limit),
        )(x2, wT, bias)
    else:
        # K-grid fallback for very large D (weight not VMEM-resident).
        tm, tn, tk = min(512, M), min(512, d_out), min(1024, d_in)
        assert M % tm == 0 and d_out % tn == 0 and d_in % tk == 0, \
            "TODO(synk): pad inputs to tile multiples for the K-grid fallback"
        x_seq_flat = pl.pallas_call(
            _matmul_bias_kgrid_kernel,
            out_shape=jax.ShapeDtypeStruct((M, d_out), out_dtype),
            grid=(M // tm, d_out // tn, d_in // tk),
            in_specs=[
                pl.BlockSpec((tm, tk), lambda i, j, k: (i, k)),
                pl.BlockSpec((tk, tn), lambda i, j, k: (k, j)),
                pl.BlockSpec((1, tn), lambda i, j, k: (0, j)),
            ],
            out_specs=pl.BlockSpec((tm, tn), lambda i, j, k: (i, j)),
            scratch_shapes=[pltpu.VMEM((tm, tn), jnp.float32)],
            compiler_params=pltpu.CompilerParams(
                dimension_semantics=("parallel", "parallel", "arbitrary"),
                vmem_limit_bytes=vmem_limit),
        )(x2, wT, bias)

    if control:
        row_ids = tuple(b * S + last_idx for b in range(B))
        kernel2 = functools.partial(
            _probe_control_kernel, gamma=float(gamma), thres=float(thres),
            newton_iters=int(newton_iters), row_ids=row_ids)

        vmem = pltpu.MemorySpace.VMEM
        smem = pltpu.MemorySpace.SMEM
        x_out_flat, p_pre, p_post = pl.pallas_call(
            kernel2,
            out_shape=(jax.ShapeDtypeStruct((M, d_out), out_dtype),
                       jax.ShapeDtypeStruct((B, 1), jnp.float32),
                       jax.ShapeDtypeStruct((B, 1), jnp.float32)),
            in_specs=[pl.BlockSpec(memory_space=pl.ANY),     # x_seq (aliased)
                      pl.BlockSpec(memory_space=vmem),       # w_row
                      pl.BlockSpec(memory_space=smem)],      # scalars
            out_specs=(pl.BlockSpec(memory_space=pl.ANY),
                       pl.BlockSpec(memory_space=vmem),
                       pl.BlockSpec(memory_space=vmem)),
            scratch_shapes=[pltpu.VMEM((B, d_out), out_dtype),
                            pltpu.SemaphoreType.DMA((B,))],
            input_output_aliases={0: 0},                     # in-place row update
        )(x_seq_flat, w_row, scal)
        x_seq = x_out_flat.reshape(B, S, d_out)
        p_pre, p_post = p_pre[:, 0], p_post[:, 0]
    else:
        # Probe only (O(B*D)): plain JAX is cheaper than another kernel launch.
        x_seq = x_seq_flat.reshape(B, S, d_out)
        c = x_seq[:, last_idx, :].astype(jnp.float32) @ w_row[0]
        p_pre = jax.nn.sigmoid(scal[1] - c)
        p_post = p_pre

    return x_seq, p_pre, p_post


# ---------------------------------------------------------------------------
# Pure-JAX f32 reference (mirrors the PyTorch module) for a sanity check
# ---------------------------------------------------------------------------
def _reference_forward(x, position_ids, base_w, base_b, probe_w, probe_b,
                       *, gamma=0.01, thres=0.05, control=True):
    last_idx = position_ids.shape[1] - 1
    x_seq = jnp.einsum("bsd,od->bso", x, base_w) + base_b
    w = probe_w[0] - probe_w[1]
    a = jnp.sum(w * w)
    b_diff = probe_b[1] - probe_b[0]
    x_last = x_seq[:, last_idx, :]
    c = x_last @ w
    p_pre = jax.nn.sigmoid(b_diff - c)
    if control:
        toxic = c < -thres
        c_t = jnp.where(toxic, c, 0.0)
        lam = 1.0 / (1.0 + jnp.exp(c_t))
        for _ in range(25):
            e = jnp.exp(jnp.minimum(lam * a + c_t, 60.0))
            f = lam * e + lam - 1.0
            fp = e * (1.0 + lam * a) + 1.0
            lam = jnp.clip(lam - f / fp, 1e-8, 1.0)
        lam = jnp.where(toxic, lam, 0.0)
        x_seq = x_seq.at[:, last_idx, :].set(x_last + gamma * lam[:, None] * w[None, :])
        c_adj = c + gamma * lam * a
    else:
        c_adj = c
    p_post = jax.nn.sigmoid(b_diff - c_adj)
    return x_seq, p_pre, p_post


if __name__ == "__main__":
    B, S, D = 2, 8, 32

    key = jax.random.PRNGKey(0)
    k1, k2, k3, k4, k5 = jax.random.split(key, 5)

    x = jax.random.normal(k1, (B, S, D), dtype=jnp.float32)
    bound = 1.0 / (D ** 0.5)
    base_w = jax.random.uniform(k2, (D, D), jnp.float32, -bound, bound)   # nn.Linear(D, D)
    base_b = jax.random.uniform(k3, (D,), jnp.float32, -bound, bound)
    probe_w = jax.random.uniform(k4, (2, D), jnp.float32, -bound, bound)  # nn.Linear(D, 2)
    probe_b = jax.random.uniform(k5, (2,), jnp.float32, -bound, bound)
    position_ids = jnp.broadcast_to(jnp.arange(S, dtype=jnp.int32)[None, :], (B, S))

    # One-time parameter preprocessing (weight transpose/cast hoisted here).
    params = prepare_linear_control_params(base_w, base_b, probe_w, probe_b)

    fwd = jax.jit(functools.partial(linear_control_forward,
                                    gamma=0.01, thres=0.05, control=True))
    x_seq, p_pre, p_post = fwd(x, position_ids, *params)
    jax.block_until_ready((x_seq, p_pre, p_post))

    # Sanity check against the f32 reference (bf16 MXU -> loose tolerance).
    x_ref, pre_ref, post_ref = _reference_forward(
        x, position_ids, base_w, base_b, probe_w, probe_b,
        gamma=0.01, thres=0.05, control=True)
    assert float(jnp.max(jnp.abs(x_seq - x_ref))) < 0.1
    assert float(jnp.max(jnp.abs(p_pre - pre_ref))) < 0.05
    assert float(jnp.max(jnp.abs(p_post - post_ref))) < 0.05

    print("KERNEL_OK")
</pallas_src>

<mosaic_0001>
module attributes {stable_mosaic.version = 11 : i64} {
  func.func @_matmul_bias_resident_kernel(%arg0: i32, %arg1: memref<8x32xbf16, #tpu.memory_space<vmem>>, %arg2: memref<32x32xbf16, #tpu.memory_space<vmem>>, %arg3: memref<1x32xf32, #tpu.memory_space<vmem>>, %arg4: memref<8x32xf32, #tpu.memory_space<vmem>>) attributes {dimension_semantics = [#tpu.dimension_semantics<parallel>], iteration_bounds = array<i64: 2>, scalar_prefetch = 0 : i64, scratch_operands = 0 : i64, tpu.core_type = #tpu.core_type<tc>, window_params = [{transform_indices = @transform_0, window_bounds = array<i64: 8, 32>}, {pipeline_mode = #tpu.pipeline_mode<synchronous>, transform_indices = @transform_1, window_bounds = array<i64: 32, 32>}, {pipeline_mode = #tpu.pipeline_mode<synchronous>, transform_indices = @transform_2, window_bounds = array<i64: 1, 32>}, {transform_indices = @transform_3, window_bounds = array<i64: 8, 32>}]} {
    %c0 = arith.constant 0 : index
    %c0_0 = arith.constant 0 : index
    %0 = vector.load %arg1[%c0, %c0_0] : memref<8x32xbf16, #tpu.memory_space<vmem>>, vector<8x32xbf16>
    %c0_1 = arith.constant 0 : index
    %c0_2 = arith.constant 0 : index
    %1 = vector.load %arg2[%c0_1, %c0_2] : memref<32x32xbf16, #tpu.memory_space<vmem>>, vector<32x32xbf16>
    %cst = arith.constant dense<0.000000e+00> : vector<8x32xf32>
    %2 = tpu.matmul %0, %1, %cst {dimension_numbers = #tpu.dot_dimension_numbers<[1], [0], [0], [1], [0, 0, 1, 1], [], []>} : vector<8x32xbf16>, vector<32x32xbf16>, vector<8x32xf32> -> vector<8x32xf32>
    %c0_3 = arith.constant 0 : index
    %c0_4 = arith.constant 0 : index
    %3 = vector.load %arg3[%c0_3, %c0_4] : memref<1x32xf32, #tpu.memory_space<vmem>>, vector<1x32xf32>
    %4 = vector.broadcast %3 : vector<1x32xf32> to vector<8x32xf32>
    %5 = arith.addf %2, %4 : vector<8x32xf32>
    %c0_5 = arith.constant 0 : index
    %c0_6 = arith.constant 0 : index
    %6 = vector.load %arg4[%c0_5, %c0_6] : memref<8x32xf32, #tpu.memory_space<vmem>>, vector<8x32xf32>
    tpu.vector_store %arg4[%c0_5, %c0_6], %5 {strides = array<i32>} : memref<8x32xf32, #tpu.memory_space<vmem>>, vector<8x32xf32>,
    return
  }
  func.func @transform_0(%arg0: i32) -> (i32, i32) {
    %c0_i32 = arith.constant 0 : i32
    %c0_i32_0 = arith.constant 0 : i32
    return %arg0, %c0_i32 : i32, i32
  }
  func.func @transform_1(%arg0: i32) -> (i32, i32) {
    %c0_i32 = arith.constant 0 : i32
    %c0_i32_0 = arith.constant 0 : i32
    %c0_i32_1 = arith.constant 0 : i32
    return %c0_i32, %c0_i32_0 : i32, i32
  }
  func.func @transform_2(%arg0: i32) -> (i32, i32) {
    %c0_i32 = arith.constant 0 : i32
    %c0_i32_0 = arith.constant 0 : i32
    %c0_i32_1 = arith.constant 0 : i32
    return %c0_i32, %c0_i32_0 : i32, i32
  }
  func.func @transform_3(%arg0: i32) -> (i32, i32) {
    %c0_i32 = arith.constant 0 : i32
    %c0_i32_0 = arith.constant 0 : i32
    return %arg0, %c0_i32 : i32, i32
  }
}

module attributes {stable_mosaic.version = 11 : i64} {
  func.func @_probe_control_kernel(%arg0: memref<16x32xf32, #tpu.memory_space<any>>, %arg1: memref<1x32xf32, #tpu.memory_space<vmem>>, %arg2: memref<2xf32, #tpu.memory_space<smem>>, %arg3: memref<16x32xf32, #tpu.memory_space<any>>, %arg4: memref<2x1xf32, #tpu.memory_space<vmem>>, %arg5: memref<2x1xf32, #tpu.memory_space<vmem>>, %arg6: memref<2x32xf32, #tpu.memory_space<vmem>>, %arg7: memref<2x!tpu.dma_semaphore, #tpu.memory_space<semaphore_mem>>) attributes {dimension_semantics = [], scalar_prefetch = 0 : i64, scratch_operands = 2 : i64, tpu.core_type = #tpu.core_type<tc>} {
    %c0_i32 = arith.constant 0 : i32
    %c7_i32 = arith.constant 7 : i32
    %c0_i32_0 = arith.constant 0 : i32
    %0 = tpu.memref_slice %arg0[%c7_i32, %c0_i32_0] : memref<16x32xf32, #tpu.memory_space<any>> -> memref<1x32xf32, #tpu.memory_space<any>>
    %c0_i32_1 = arith.constant 0 : i32
    %c0_i32_2 = arith.constant 0 : i32
    %1 = tpu.memref_slice %arg6[%c0_i32_1, %c0_i32_2] : memref<2x32xf32, #tpu.memory_space<vmem>> -> memref<1x32xf32, #tpu.memory_space<vmem>>
    %2 = tpu.memref_slice %arg7[%c0_i32] : memref<2x!tpu.dma_semaphore, #tpu.memory_space<semaphore_mem>> -> memref<1x!tpu.dma_semaphore, #tpu.memory_space<semaphore_mem>>
    %3 = tpu.memref_squeeze %2 : memref<1x!tpu.dma_semaphore, #tpu.memory_space<semaphore_mem>> -> memref<!tpu.dma_semaphore, #tpu.memory_space<semaphore_mem>>
    tpu.enqueue_dma source(%0 : memref<1x32xf32, #tpu.memory_space<any>>) target(%1 : memref<1x32xf32, #tpu.memory_space<vmem>>) target_semaphore(%3 : memref<!tpu.dma_semaphore, #tpu.memory_space<semaphore_mem>>)
    %c1_i32 = arith.constant 1 : i32
    %c15_i32 = arith.constant 15 : i32
    %c0_i32_3 = arith.constant 0 : i32
    %4 = tpu.memref_slice %arg0[%c15_i32, %c0_i32_3] : memref<16x32xf32, #tpu.memory_space<any>> -> memref<1x32xf32, #tpu.memory_space<any>>
    %c1_i32_4 = arith.constant 1 : i32
    %c0_i32_5 = arith.constant 0 : i32
    %5 = tpu.memref_slice %arg6[%c1_i32_4, %c0_i32_5] : memref<2x32xf32, #tpu.memory_space<vmem>> -> memref<1x32xf32, #tpu.memory_space<vmem>>
    %6 = tpu.memref_slice %arg7[%c1_i32] : memref<2x!tpu.dma_semaphore, #tpu.memory_space<semaphore_mem>> -> memref<1x!tpu.dma_semaphore, #tpu.memory_space<semaphore_mem>>
    %7 = tpu.memref_squeeze %6 : memref<1x!tpu.dma_semaphore, #tpu.memory_space<semaphore_mem>> -> memref<!tpu.dma_semaphore, #tpu.memory_space<semaphore_mem>>
    tpu.enqueue_dma source(%4 : memref<1x32xf32, #tpu.memory_space<any>>) target(%5 : memref<1x32xf32, #tpu.memory_space<vmem>>) target_semaphore(%7 : memref<!tpu.dma_semaphore, #tpu.memory_space<semaphore_mem>>)
    %c0_i32_6 = arith.constant 0 : i32
    %c7_i32_7 = arith.constant 7 : i32
    %c0_i32_8 = arith.constant 0 : i32
    %8 = tpu.memref_slice %arg0[%c7_i32_7, %c0_i32_8] : memref<16x32xf32, #tpu.memory_space<any>> -> memref<1x32xf32, #tpu.memory_space<any>>
    %c0_i32_9 = arith.constant 0 : i32
    %c0_i32_10 = arith.constant 0 : i32
    %9 = tpu.memref_slice %arg6[%c0_i32_9, %c0_i32_10] : memref<2x32xf32, #tpu.memory_space<vmem>> -> memref<1x32xf32, #tpu.memory_space<vmem>>
    %10 = tpu.memref_slice %arg7[%c0_i32_6] : memref<2x!tpu.dma_semaphore, #tpu.memory_space<semaphore_mem>> -> memref<1x!tpu.dma_semaphore, #tpu.memory_space<semaphore_mem>>
    %11 = tpu.memref_squeeze %10 : memref<1x!tpu.dma_semaphore, #tpu.memory_space<semaphore_mem>> -> memref<!tpu.dma_semaphore, #tpu.memory_space<semaphore_mem>>
    tpu.wait_dma2 semaphore(%11 : memref<!tpu.dma_semaphore, #tpu.memory_space<semaphore_mem>>) src(%8 : memref<1x32xf32, #tpu.memory_space<any>>) dst(%9 : memref<1x32xf32, #tpu.memory_space<vmem>>)
    %c1_i32_11 = arith.constant 1 : i32
    %c15_i32_12 = arith.constant 15 : i32
    %c0_i32_13 = arith.constant 0 : i32
    %12 = tpu.memref_slice %arg0[%c15_i32_12, %c0_i32_13] : memref<16x32xf32, #tpu.memory_space<any>> -> memref<1x32xf32, #tpu.memory_space<any>>
    %c1_i32_14 = arith.constant 1 : i32
    %c0_i32_15 = arith.constant 0 : i32
    %13 = tpu.memref_slice %arg6[%c1_i32_14, %c0_i32_15] : memref<2x32xf32, #tpu.memory_space<vmem>> -> memref<1x32xf32, #tpu.memory_space<vmem>>
    %14 = tpu.memref_slice %arg7[%c1_i32_11] : memref<2x!tpu.dma_semaphore, #tpu.memory_space<semaphore_mem>> -> memref<1x!tpu.dma_semaphore, #tpu.memory_space<semaphore_mem>>
    %15 = tpu.memref_squeeze %14 : memref<1x!tpu.dma_semaphore, #tpu.memory_space<semaphore_mem>> -> memref<!tpu.dma_semaphore, #tpu.memory_space<semaphore_mem>>
    tpu.wait_dma2 semaphore(%15 : memref<!tpu.dma_semaphore, #tpu.memory_space<semaphore_mem>>) src(%12 : memref<1x32xf32, #tpu.memory_space<any>>) dst(%13 : memref<1x32xf32, #tpu.memory_space<vmem>>)
    %c0 = arith.constant 0 : index
    %c0_16 = arith.constant 0 : index
    %16 = vector.load %arg6[%c0, %c0_16] : memref<2x32xf32, #tpu.memory_space<vmem>>, vector<2x32xf32>
    %c0_17 = arith.constant 0 : index
    %c0_18 = arith.constant 0 : index
    %17 = vector.load %arg1[%c0_17, %c0_18] : memref<1x32xf32, #tpu.memory_space<vmem>>, vector<1x32xf32>
    %c0_19 = arith.constant 0 : index
    %18 = memref.load %arg2[%c0_19] : memref<2xf32, #tpu.memory_space<smem>>
    %c1 = arith.constant 1 : index
    %19 = memref.load %arg2[%c1] : memref<2xf32, #tpu.memory_space<smem>>
    %20 = vector.broadcast %17 : vector<1x32xf32> to vector<2x32xf32>
    %21 = arith.mulf %16, %20 : vector<2x32xf32>
    %cst = arith.constant dense<0.000000e+00> : vector<2xf32>
    %22 = vector.multi_reduction <add>, %21, %cst [1] : vector<2x32xf32> to vector<2xf32>
    %23 = vector.shape_cast %22 : vector<2xf32> to vector<2x1xf32>
    %24 = vector.broadcast %19 : f32 to vector<2x1xf32>
    %25 = arith.subf %23, %24 : vector<2x1xf32>
    %26 = math.exp %25 : vector<2x1xf32>
    %cst_20 = arith.constant 1.000000e+00 : f32
    %27 = vector.broadcast %cst_20 : f32 to vector<2x1xf32>
    %28 = arith.addf %27, %26 : vector<2x1xf32>
    %cst_21 = arith.constant 1.000000e+00 : f32
    %29 = vector.broadcast %cst_21 : f32 to vector<2x1xf32>
    %30 = arith.divf %29, %28 : vector<2x1xf32>
    %c0_22 = arith.constant 0 : index
    %c0_23 = arith.constant 0 : index
    %31 = vector.load %arg4[%c0_22, %c0_23] : memref<2x1xf32, #tpu.memory_space<vmem>>, vector<2x1xf32>
    tpu.vector_store %arg4[%c0_22, %c0_23], %30 {strides = array<i32>} : memref<2x1xf32, #tpu.memory_space<vmem>>, vector<2x1xf32>,
    %cst_24 = arith.constant -5.000000e-02 : f32
    %32 = vector.broadcast %cst_24 : f32 to vector<2x1xf32>
    %33 = arith.cmpf olt, %23, %32 : vector<2x1xf32>
    %cst_25 = arith.constant 0.000000e+00 : f32
    %34 = vector.broadcast %cst_25 : f32 to vector<2x1xf32>
    %35 = arith.select %33, %23, %34 : vector<2x1xi1>, vector<2x1xf32>
    %36 = math.exp %35 : vector<2x1xf32>
    %cst_26 = arith.constant 1.000000e+00 : f32
    %37 = vector.broadcast %cst_26 : f32 to vector<2x1xf32>
    %38 = arith.addf %37, %36 : vector<2x1xf32>
    %cst_27 = arith.constant 1.000000e+00 : f32
    %39 = vector.broadcast %cst_27 : f32 to vector<2x1xf32>
    %40 = arith.divf %39, %38 : vector<2x1xf32>
    %c0_i32_28 = arith.constant 0 : i32
    %41 = vector.broadcast %18 : f32 to vector<2x1xf32>
    %42 = arith.mulf %40, %41 : vector<2x1xf32>
    %43 = arith.addf %42, %35 : vector<2x1xf32>
    %cst_29 = arith.constant 6.000000e+01 : f32
    %44 = vector.broadcast %cst_29 : f32 to vector<2x1xf32>
    %45 = arith.minimumf %43, %44 : vector<2x1xf32>
    %46 = math.exp %45 : vector<2x1xf32>
    %47 = arith.mulf %40, %46 : vector<2x1xf32>
    %48 = arith.addf %47, %40 : vector<2x1xf32>
    %cst_30 = arith.constant 1.000000e+00 : f32
    %49 = vector.broadcast %cst_30 : f32 to vector<2x1xf32>
    %50 = arith.subf %48, %49 : vector<2x1xf32>
    %51 = vector.broadcast %18 : f32 to vector<2x1xf32>
    %52 = arith.mulf %40, %51 : vector<2x1xf32>
    %cst_31 = arith.constant 1.000000e+00 : f32
    %53 = vector.broadcast %cst_31 : f32 to vector<2x1xf32>
    %54 = arith.addf %53, %52 : vector<2x1xf32>
    %55 = arith.mulf %46, %54 : vector<2x1xf32>
    %cst_32 = arith.constant 1.000000e+00 : f32
    %56 = vector.broadcast %cst_32 : f32 to vector<2x1xf32>
    %57 = arith.addf %55, %56 : vector<2x1xf32>
    %58 = arith.divf %50, %57 : vector<2x1xf32>
    %59 = arith.subf %40, %58 : vector<2x1xf32>
    %cst_33 = arith.constant 9.99999993E-9 : f32
    %cst_34 = arith.constant 1.000000e+00 : f32
    %60 = vector.broadcast %cst_33 : f32 to vector<2x1xf32>
    %61 = arith.maximumf %60, %59 : vector<2x1xf32>
    %62 = vector.broadcast %cst_34 : f32 to vector<2x1xf32>
    %63 = arith.minimumf %62, %61 : vector<2x1xf32>
    %c1_i32_35 = arith.constant 1 : i32
    %64 = vector.broadcast %18 : f32 to vector<2x1xf32>
    %65 = arith.mulf %63, %64 : vector<2x1xf32>
    %66 = arith.addf %65, %35 : vector<2x1xf32>
    %cst_36 = arith.constant 6.000000e+01 : f32
    %67 = vector.broadcast %cst_36 : f32 to vector<2x1xf32>
    %68 = arith.minimumf %66, %67 : vector<2x1xf32>
    %69 = math.exp %68 : vector<2x1xf32>
    %70 = arith.mulf %63, %69 : vector<2x1xf32>
    %71 = arith.addf %70, %63 : vector<2x1xf32>
    %cst_37 = arith.constant 1.000000e+00 : f32
    %72 = vector.broadcast %cst_37 : f32 to vector<2x1xf32>
    %73 = arith.subf %71, %72 : vector<2x1xf32>
    %74 = vector.broadcast %18 : f32 to vector<2x1xf32>
    %75 = arith.mulf %63, %74 : vector<2x1xf32>
    %cst_38 = arith.constant 1.000000e+00 : f32
    %76 = vector.broadcast %cst_38 : f32 to vector<2x1xf32>
    %77 = arith.addf %76, %75 : vector<2x1xf32>
    %78 = arith.mulf %69, %77 : vector<2x1xf32>
    %cst_39 = arith.constant 1.000000e+00 : f32
    %79 = vector.broadcast %cst_39 : f32 to vector<2x1xf32>
    %80 = arith.addf %78, %79 : vector<2x1xf32>
    %81 = arith.divf %73, %80 : vector<2x1xf32>
    %82 = arith.subf %63, %81 : vector<2x1xf32>
    %cst_40 = arith.constant 9.99999993E-9 : f32
    %cst_41 = arith.constant 1.000000e+00 : f32
    %83 = vector.broadcast %cst_40 : f32 to vector<2x1xf32>
    %84 = arith.maximumf %83, %82 : vector<2x1xf32>
    %85 = vector.broadcast %cst_41 : f32 to vector<2x1xf32>
    %86 = arith.minimumf %85, %84 : vector<2x1xf32>
    %c2_i32 = arith.constant 2 : i32
    %87 = vector.broadcast %18 : f32 to vector<2x1xf32>
    %88 = arith.mulf %86, %87 : vector<2x1xf32>
    %89 = arith.addf %88, %35 : vector<2x1xf32>
    %cst_42 = arith.constant 6.000000e+01 : f32
    %90 = vector.broadcast %cst_42 : f32 to vector<2x1xf32>
    %91 = arith.minimumf %89, %90 : vector<2x1xf32>
    %92 = math.exp %91 : vector<2x1xf32>
    %93 = arith.mulf %86, %92 : vector<2x1xf32>
    %94 = arith.addf %93, %86 : vector<2x1xf32>
    %cst_43 = arith.constant 1.000000e+00 : f32
    %95 = vector.broadcast %cst_43 : f32 to vector<2x1xf32>
    %96 = arith.subf %94, %95 : vector<2x1xf32>
    %97 = vector.broadcast %18 : f32 to vector<2x1xf32>
    %98 = arith.mulf %86, %97 : vector<2x1xf32>
    %cst_44 = arith.constant 1.000000e+00 : f32
    %99 = vector.broadcast %cst_44 : f32 to vector<2x1xf32>
    %100 = arith.addf %99, %98 : vector<2x1xf32>
    %101 = arith.mulf %92, %100 : vector<2x1xf32>
    %cst_45 = arith.constant 1.000000e+00 : f32
    %102 = vector.broadcast %cst_45 : f32 to vector<2x1xf32>
    %103 = arith.addf %101, %102 : vector<2x1xf32>
    %104 = arith.divf %96, %103 : vector<2x1xf32>
    %105 = arith.subf %86, %104 : vector<2x1xf32>
    %cst_46 = arith.constant 9.99999993E-9 : f32
    %cst_47 = arith.constant 1.000000e+00 : f32
    %106 = vector.broadcast %cst_46 : f32 to vector<2x1xf32>
    %107 = arith.maximumf %106, %105 : vector<2x1xf32>
    %108 = vector.broadcast %cst_47 : f32 to vector<2x1xf32>
    %109 = arith.minimumf %108, %107 : vector<2x1xf32>
    %c3_i32 = arith.constant 3 : i32
    %110 = vector.broadcast %18 : f32 to vector<2x1xf32>
    %111 = arith.mulf %109, %110 : vector<2x1xf32>
    %112 = arith.addf %111, %35 : vector<2x1xf32>
    %cst_48 = arith.constant 6.000000e+01 : f32
    %113 = vector.broadcast %cst_48 : f32 to vector<2x1xf32>
    %114 = arith.minimumf %112, %113 : vector<2x1xf32>
    %115 = math.exp %114 : vector<2x1xf32>
    %116 = arith.mulf %109, %115 : vector<2x1xf32>
    %117 = arith.addf %116, %109 : vector<2x1xf32>
    %cst_49 = arith.constant 1.000000e+00 : f32
    %118 = vector.broadcast %cst_49 : f32 to vector<2x1xf32>
    %119 = arith.subf %117, %118 : vector<2x1xf32>
    %120 = vector.broadcast %18 : f32 to vector<2x1xf32>
    %121 = arith.mulf %109, %120 : vector<2x1xf32>
    %cst_50 = arith.constant 1.000000e+00 : f32
    %122 = vector.broadcast %cst_50 : f32 to vector<2x1xf32>
    %123 = arith.addf %122, %121 : vector<2x1xf32>
    %124 = arith.mulf %115, %123 : vector<2x1xf32>
    %cst_51 = arith.constant 1.000000e+00 : f32
    %125 = vector.broadcast %cst_51 : f32 to vector<2x1xf32>
    %126 = arith.addf %124, %125 : vector<2x1xf32>
    %127 = arith.divf %119, %126 : vector<2x1xf32>
    %128 = arith.subf %109, %127 : vector<2x1xf32>
    %cst_52 = arith.constant 9.99999993E-9 : f32
    %cst_53 = arith.constant 1.000000e+00 : f32
    %129 = vector.broadcast %cst_52 : f32 to vector<2x1xf32>
    %130 = arith.maximumf %129, %128 : vector<2x1xf32>
    %131 = vector.broadcast %cst_53 : f32 to vector<2x1xf32>
    %132 = arith.minimumf %131, %130 : vector<2x1xf32>
    %c4_i32 = arith.constant 4 : i32
    %133 = vector.broadcast %18 : f32 to vector<2x1xf32>
    %134 = arith.mulf %132, %133 : vector<2x1xf32>
    %135 = arith.addf %134, %35 : vector<2x1xf32>
    %cst_54 = arith.constant 6.000000e+01 : f32
    %136 = vector.broadcast %cst_54 : f32 to vector<2x1xf32>
    %137 = arith.minimumf %135, %136 : vector<2x1xf32>
    %138 = math.exp %137 : vector<2x1xf32>
    %139 = arith.mulf %132, %138 : vector<2x1xf32>
    %140 = arith.addf %139, %132 : vector<2x1xf32>
    %cst_55 = arith.constant 1.000000e+00 : f32
    %141 = vector.broadcast %cst_55 : f32 to vector<2x1xf32>
    %142 = arith.subf %140, %141 : vector<2x1xf32>
    %143 = vector.broadcast %18 : f32 to vector<2x1xf32>
    %144 = arith.mulf %132, %143 : vector<2x1xf32>
    %cst_56 = arith.constant 1.000000e+00 : f32
    %145 = vector.broadcast %cst_56 : f32 to vector<2x1xf32>
    %146 = arith.addf %145, %144 : vector<2x1xf32>
    %147 = arith.mulf %138, %146 : vector<2x1xf32>
    %cst_57 = arith.constant 1.000000e+00 : f32
    %148 = vector.broadcast %cst_57 : f32 to vector<2x1xf32>
    %149 = arith.addf %147, %148 : vector<2x1xf32>
    %150 = arith.divf %142, %149 : vector<2x1xf32>
    %151 = arith.subf %132, %150 : vector<2x1xf32>
    %cst_58 = arith.constant 9.99999993E-9 : f32
    %cst_59 = arith.constant 1.000000e+00 : f32
    %152 = vector.broadcast %cst_58 : f32 to vector<2x1xf32>
    %153 = arith.maximumf %152, %151 : vector<2x1xf32>
    %154 = vector.broadcast %cst_59 : f32 to vector<2x1xf32>
    %155 = arith.minimumf %154, %153 : vector<2x1xf32>
    %cst_60 = arith.constant 0.000000e+00 : f32
    %156 = vector.broadcast %cst_60 : f32 to vector<2x1xf32>
    %157 = arith.select %33, %155, %156 : vector<2x1xi1>, vector<2x1xf32>
    %cst_61 = arith.constant 0.00999999977 : f32
    %158 = vector.broadcast %cst_61 : f32 to vector<2x1xf32>
    %159 = arith.mulf %158, %157 : vector<2x1xf32>
    %160 = vector.broadcast %159 : vector<2x1xf32> to vector<2x32xf32>
    %161 = vector.broadcast %17 : vector<1x32xf32> to vector<2x32xf32>
    %162 = arith.mulf %160, %161 : vector<2x32xf32>
    %163 = arith.addf %16, %162 : vector<2x32xf32>
    %164 = vector.broadcast %18 : f32 to vector<2x1xf32>
    %165 = arith.mulf %159, %164 : vector<2x1xf32>
    %166 = arith.addf %23, %165 : vector<2x1xf32>
    %167 = vector.broadcast %19 : f32 to vector<2x1xf32>
    %168 = arith.subf %166, %167 : vector<2x1xf32>
    %169 = math.exp %168 : vector<2x1xf32>
    %cst_62 = arith.constant 1.000000e+00 : f32
    %170 = vector.broadcast %cst_62 : f32 to vector<2x1xf32>
    %171 = arith.addf %170, %169 : vector<2x1xf32>
    %cst_63 = arith.constant 1.000000e+00 : f32
    %172 = vector.broadcast %cst_63 : f32 to vector<2x1xf32>
    %173 = arith.divf %172, %171 : vector<2x1xf32>
    %c0_64 = arith.constant 0 : index
    %c0_65 = arith.constant 0 : index
    %174 = vector.load %arg5[%c0_64, %c0_65] : memref<2x1xf32, #tpu.memory_space<vmem>>, vector<2x1xf32>
    tpu.vector_store %arg5[%c0_64, %c0_65], %173 {strides = array<i32>} : memref<2x1xf32, #tpu.memory_space<vmem>>, vector<2x1xf32>,
    %c0_66 = arith.constant 0 : index
    %c0_67 = arith.constant 0 : index
    %175 = vector.load %arg6[%c0_66, %c0_67] : memref<2x32xf32, #tpu.memory_space<vmem>>, vector<2x32xf32>
    tpu.vector_store %arg6[%c0_66, %c0_67], %163 {strides = array<i32>} : memref<2x32xf32, #tpu.memory_space<vmem>>, vector<2x32xf32>,
    %c0_i32_68 = arith.constant 0 : i32
    %c0_i32_69 = arith.constant 0 : i32
    %c0_i32_70 = arith.constant 0 : i32
    %176 = tpu.memref_slice %arg6[%c0_i32_69, %c0_i32_70] : memref<2x32xf32, #tpu.memory_space<vmem>> -> memref<1x32xf32, #tpu.memory_space<vmem>>
    %c7_i32_71 = arith.constant 7 : i32
    %c0_i32_72 = arith.constant 0 : i32
    %177 = tpu.memref_slice %arg3[%c7_i32_71, %c0_i32_72] : memref<16x32xf32, #tpu.memory_space<any>> -> memref<1x32xf32, #tpu.memory_space<any>>
    %178 = tpu.memref_slice %arg7[%c0_i32_68] : memref<2x!tpu.dma_semaphore, #tpu.memory_space<semaphore_mem>> -> memref<1x!tpu.dma_semaphore, #tpu.memory_space<semaphore_mem>>
    %179 = tpu.memref_squeeze %178 : memref<1x!tpu.dma_semaphore, #tpu.memory_space<semaphore_mem>> -> memref<!tpu.dma_semaphore, #tpu.memory_space<semaphore_mem>>
    tpu.enqueue_dma source(%176 : memref<1x32xf32, #tpu.memory_space<vmem>>) target(%177 : memref<1x32xf32, #tpu.memory_space<any>>) target_semaphore(%179 : memref<!tpu.dma_semaphore, #tpu.memory_space<semaphore_mem>>)
    %c1_i32_73 = arith.constant 1 : i32
    %c1_i32_74 = arith.constant 1 : i32
    %c0_i32_75 = arith.constant 0 : i32
    %180 = tpu.memref_slice %arg6[%c1_i32_74, %c0_i32_75] : memref<2x32xf32, #tpu.memory_space<vmem>> -> memref<1x32xf32, #tpu.memory_space<vmem>>
    %c15_i32_76 = arith.constant 15 : i32
    %c0_i32_77 = arith.constant 0 : i32
    %181 = tpu.memref_slice %arg3[%c15_i32_76, %c0_i32_77] : memref<16x32xf32, #tpu.memory_space<any>> -> memref<1x32xf32, #tpu.memory_space<any>>
    %182 = tpu.memref_slice %arg7[%c1_i32_73] : memref<2x!tpu.dma_semaphore, #tpu.memory_space<semaphore_mem>> -> memref<1x!tpu.dma_semaphore, #tpu.memory_space<semaphore_mem>>
    %183 = tpu.memref_squeeze %182 : memref<1x!tpu.dma_semaphore, #tpu.memory_space<semaphore_mem>> -> memref<!tpu.dma_semaphore, #tpu.memory_space<semaphore_mem>>
    tpu.enqueue_dma source(%180 : memref<1x32xf32, #tpu.memory_space<vmem>>) target(%181 : memref<1x32xf32, #tpu.memory_space<any>>) target_semaphore(%183 : memref<!tpu.dma_semaphore, #tpu.memory_space<semaphore_mem>>)
    %c0_i32_78 = arith.constant 0 : i32
    %c0_i32_79 = arith.constant 0 : i32
    %c0_i32_80 = arith.constant 0 : i32
    %184 = tpu.memref_slice %arg6[%c0_i32_79, %c0_i32_80] : memref<2x32xf32, #tpu.memory_space<vmem>> -> memref<1x32xf32, #tpu.memory_space<vmem>>
    %c7_i32_81 = arith.constant 7 : i32
    %c0_i32_82 = arith.constant 0 : i32
    %185 = tpu.memref_slice %arg3[%c7_i32_81, %c0_i32_82] : memref<16x32xf32, #tpu.memory_space<any>> -> memref<1x32xf32, #tpu.memory_space<any>>
    %186 = tpu.memref_slice %arg7[%c0_i32_78] : memref<2x!tpu.dma_semaphore, #tpu.memory_space<semaphore_mem>> -> memref<1x!tpu.dma_semaphore, #tpu.memory_space<semaphore_mem>>
    %187 = tpu.memref_squeeze %186 : memref<1x!tpu.dma_semaphore, #tpu.memory_space<semaphore_mem>> -> memref<!tpu.dma_semaphore, #tpu.memory_space<semaphore_mem>>
    tpu.wait_dma2 semaphore(%187 : memref<!tpu.dma_semaphore, #tpu.memory_space<semaphore_mem>>) src(%184 : memref<1x32xf32, #tpu.memory_space<vmem>>) dst(%185 : memref<1x32xf32, #tpu.memory_space<any>>)
    %c1_i32_83 = arith.constant 1 : i32
    %c1_i32_84 = arith.constant 1 : i32
    %c0_i32_85 = arith.constant 0 : i32
    %188 = tpu.memref_slice %arg6[%c1_i32_84, %c0_i32_85] : memref<2x32xf32, #tpu.memory_space<vmem>> -> memref<1x32xf32, #tpu.memory_space<vmem>>
    %c15_i32_86 = arith.constant 15 : i32
    %c0_i32_87 = arith.constant 0 : i32
    %189 = tpu.memref_slice %arg3[%c15_i32_86, %c0_i32_87] : memref<16x32xf32, #tpu.memory_space<any>> -> memref<1x32xf32, #tpu.memory_space<any>>
    %190 = tpu.memref_slice %arg7[%c1_i32_83] : memref<2x!tpu.dma_semaphore, #tpu.memory_space<semaphore_mem>> -> memref<1x!tpu.dma_semaphore, #tpu.memory_space<semaphore_mem>>
    %191 = tpu.memref_squeeze %190 : memref<1x!tpu.dma_semaphore, #tpu.memory_space<semaphore_mem>> -> memref<!tpu.dma_semaphore, #tpu.memory_space<semaphore_mem>>
    tpu.wait_dma2 semaphore(%191 : memref<!tpu.dma_semaphore, #tpu.memory_space<semaphore_mem>>) src(%188 : memref<1x32xf32, #tpu.memory_space<vmem>>) dst(%189 : memref<1x32xf32, #tpu.memory_space<any>>)
    return
  }
}

</mosaic_0001>

<llo_original>
// kernel: linear_control_forward.2
$region0: #{linear_control_forward.2}
  #allocation0 [shape = 'u32[]', space=smem, size = 0x4, offset = 0x4, fixed_abs, tag = 'smem constant byte address 0x4 - core index']
  #allocation1 [shape = 'u32[72,128]{1,0:T(1,128)}', space=vmem, size = 0x9000, scoped, tag = 'internal scratch']
  %s0 = inlined_call_operand.vmem [shape: bf16[16,32], index: 0, kind: input, shape index: {}]
  %s1 = inlined_call_operand.vmem [shape: bf16[32,32], index: 1, kind: input, shape index: {}]
  %s2 = inlined_call_operand.vmem [shape: f32[1,32], index: 2, kind: input, shape index: {}]
  %s3 = inlined_call_operand.vmem [shape: f32[16,32], index: 3, kind: output, shape index: {}]
  %s4 = sld [smem:[#allocation0]]
  $region45: #{linear_control_forward.2} parent=0
    _
  %s6 = ssub.s32 1, %s4
  %s7 = scalar_select 0, %s6, %s4
  loop: start=0, step=1, limit=4
  $region2: #{linear_control_forward.2} parent=0 // loop_pre_header
    _
  $region3: #{linear_control_forward.2} parent=0 // loop_header
    %s9 = sphi 0, %s13
    %p10 = scmp.ge.s32.totalorder %s9, 4
    %s19 = sphi 0, %s21
    %s22 = sphi 0, %s19
    %s23 = sphi 0, %s22
    %s39 = sphi 0, %s23
    %s43 = sphi 0, %s43
    %s45 = sphi 0, %s43
    %s46 = sphi 0, %s45
    %s60 = sphi 0, %s46
    %s64 = sphi 0, %s64
    %s66 = sphi 0, %s64
    %s67 = sphi 0, %s66
    %s81 = sphi 0, %s67
    %s87 = sphi 0, %s89
    %s90 = sphi 0, %s87
    %s91 = sphi 0, %s90
    %s107 = sphi 0, %s91
  $region4: #{linear_control_forward.2} parent=0 // loop_header_branch
    %12 = sbr.rel (%p10) target = $region8
  $region5: #{linear_control_forward.2} parent=0 // loop_body
    %s14 = ssub.s32 %s9, 1
    %s15 = ssub.s32 %s9, 2
    %s16 = sadd.s32 %s9, 1
    %s17 = ssub.s32 %s9, %s16
    %p18 = scmp.eq.s32.totalorder %s17, 0
    %s20 = sadd.s32 %s19, 1
    %s21 = scalar_select %p18, %s19, %s20
    %p24 = pneg %p18
    %p25 = scmp.eq.s32.totalorder %s9, 1
    %p26 = por %p24, %p25
    %p27 = scmp.ne.s32.totalorder %s19, %s22
    %p28 = scmp.eq.s32.totalorder %s9, 0
    %p29 = por %p27, %p28
    %p30 = scmp.ne.s32.totalorder %s19, %s22
    %p31 = scmp.eq.s32.totalorder %s14, 1
    %p32 = por %p30, %p31
    %p33 = scmp.ne.s32.totalorder %s22, %s23
    %p34 = scmp.eq.s32.totalorder %s14, 0
    %p35 = por %p33, %p34
    %p36 = scmp.ne.s32.totalorder %s22, %s23
    %p37 = scmp.eq.s32.totalorder %s15, 1
    %p38 = por %p36, %p37
    %p40 = scmp.ne.s32.totalorder %s23, %s39
    %p41 = scmp.eq.s32.totalorder %s15, 0
    %p42 = por %p40, %p41
    %s44 = sadd.s32 %s43, 1
    %p47 = scmp.eq.s32.totalorder %s9, 1
    %p48 = scmp.ne.s32.totalorder %s43, %s45
    %p49 = scmp.eq.s32.totalorder %s9, 0
    %p50 = por %p48, %p49
    %p51 = scmp.ne.s32.totalorder %s43, %s45
    %p52 = scmp.eq.s32.totalorder %s14, 1
    %p53 = por %p51, %p52
    %p54 = scmp.ne.s32.totalorder %s45, %s46
    %p55 = scmp.eq.s32.totalorder %s14, 0
    %p56 = por %p54, %p55
    %p57 = scmp.ne.s32.totalorder %s45, %s46
    %p58 = scmp.eq.s32.totalorder %s15, 1
    %p59 = por %p57, %p58
    %p61 = scmp.ne.s32.totalorder %s46, %s60
    %p62 = scmp.eq.s32.totalorder %s15, 0
    %p63 = por %p61, %p62
    %s65 = sadd.s32 %s64, 1
    %p68 = scmp.eq.s32.totalorder %s9, 1
    %p69 = scmp.ne.s32.totalorder %s64, %s66
    %p70 = scmp.eq.s32.totalorder %s9, 0
    %p71 = por %p69, %p70
    %p72 = scmp.ne.s32.totalorder %s64, %s66
    %p73 = scmp.eq.s32.totalorder %s14, 1
    %p74 = por %p72, %p73
    %p75 = scmp.ne.s32.totalorder %s66, %s67
    %p76 = scmp.eq.s32.totalorder %s14, 0
    %p77 = por %p75, %p76
    %p78 = scmp.ne.s32.totalorder %s66, %s67
    %p79 = scmp.eq.s32.totalorder %s15, 1
    %p80 = por %p78, %p79
    %p82 = scmp.ne.s32.totalorder %s67, %s81
    %p83 = scmp.eq.s32.totalorder %s15, 0
    %p84 = por %p82, %p83
    %s85 = ssub.s32 %s9, %s16
    %p86 = scmp.eq.s32.totalorder %s85, 0
    %s88 = sadd.s32 %s87, 1
    %s89 = scalar_select %p86, %s87, %s88
    %p92 = pneg %p86
    %p93 = scmp.eq.s32.totalorder %s9, 1
    %p94 = por %p92, %p93
    %p95 = scmp.ne.s32.totalorder %s87, %s90
    %p96 = scmp.eq.s32.totalorder %s9, 0
    %p97 = por %p95, %p96
    %p98 = scmp.ne.s32.totalorder %s87, %s90
    %p99 = scmp.eq.s32.totalorder %s14, 1
    %p100 = por %p98, %p99
    %p101 = scmp.ne.s32.totalorder %s90, %s91
    %p102 = scmp.eq.s32.totalorder %s14, 0
    %p103 = por %p101, %p102
    %p104 = scmp.ne.s32.totalorder %s90, %s91
    %p105 = scmp.eq.s32.totalorder %s15, 1
    %p106 = por %p104, %p105
    %p108 = scmp.ne.s32.totalorder %s91, %s107
    %p109 = scmp.eq.s32.totalorder %s15, 0
    %p110 = por %p108, %p109
    %p111 = scmp.le.s32.totalorder 1, %s9
    %p112 = scmp.lt.s32.totalorder %s9, 3
    %p113 = pnand %p111, %p112
    %p114 = pneg %p113
    // Predicated region
    $region9: #{linear_control_forward.2} parent=5 // pred_check
      _
    $region10: #{linear_control_forward.2} parent=5 // pred_check_branch
      %116 = sbr.rel (%p113) target = $region12
    $region11: #{linear_control_forward.2} parent=5 // pred_region
      %s117 = ssub.s32 %s9, 1
      // Predicated region
      $region13: #{linear_control_forward.2} parent=11 // pred_check
        %p118 = pneg %p56
      $region14: #{linear_control_forward.2} parent=11 // pred_check_branch
        %120 = sbr.rel (%p118) target = $region16
      $region15: #{linear_control_forward.2} parent=11 // pred_region
        _
      $region16: #{linear_control_forward.2} parent=11 // pred_fallthru
        _
      // Predicated region
      $region17: #{linear_control_forward.2} parent=11 // pred_check
        %p121 = pneg %p77
      $region18: #{linear_control_forward.2} parent=11 // pred_check_branch
        %123 = sbr.rel (%p121) target = $region20
      $region19: #{linear_control_forward.2} parent=11 // pred_region
        _
      $region20: #{linear_control_forward.2} parent=11 // pred_fallthru
        _
    $region12: #{linear_control_forward.2} parent=5 // pred_fallthru
      _
    %p124 = scmp.lt.s32.totalorder %s9, 2
    // Predicated region
    $region21: #{linear_control_forward.2} parent=5 // pred_check
      %p125 = pneg %p124
    $region22: #{linear_control_forward.2} parent=5 // pred_check_branch
      %127 = sbr.rel (%p125) target = $region24
    $region23: #{linear_control_forward.2} parent=5 // pred_region
      // Predicated region
      $region25: #{linear_control_forward.2} parent=23 // pred_check
        %p128 = pneg %p29
      $region26: #{linear_control_forward.2} parent=23 // pred_check_branch
        %130 = sbr.rel (%p128) target = $region28
      $region27: #{linear_control_forward.2} parent=23 // pred_region
        %p131 = scmp.lt.s32.totalorder %s9, 1
        %s132 = scalar_select %p131, %s9, 1
        %s133 = smul.addr %s132, 4
        %s134 = scalar_lea.vmem %s0, %s133
      $region28: #{linear_control_forward.2} parent=23 // pred_fallthru
        _
    $region24: #{linear_control_forward.2} parent=5 // pred_fallthru
      _
    %p135 = scmp.le.s32.totalorder 1, %s9
    %p136 = scmp.lt.s32.totalorder %s9, 3
    %p137 = pnand %p135, %p136
    %p138 = pneg %p137
    // Predicated region
    $region29: #{linear_control_forward.2} parent=5 // pred_check
      _
    $region30: #{linear_control_forward.2} parent=5 // pred_check_branch
      %140 = sbr.rel (%p137) target = $region32
    $region31: #{linear_control_forward.2} parent=5 // pred_region
      %s141 = ssub.s32 %s9, 1
      %p142 = scmp.lt.s32.totalorder %s14, 1
      %s143 = scalar_select %p142, %s14, 1
      %s144 = smul.addr %s143, 4
      %s145 = scalar_lea.vmem %s0, %s144
      %p146 = pneg %p35
      %p147 = pneg %p32
      %p148 = pneg %p56
      %p149 = pneg %p53
      %p150 = pneg %p77
      %p151 = pneg %p74
      %p152 = pneg %p103
      %p153 = pneg %p100
      %p154 = scmp.lt.s32.totalorder %s14, 1
      %s155 = scalar_select %p154, %s14, 1
      %s156 = smul.addr %s155, 8
      %s157 = scalar_lea.vmem %s3, %s156
      %p158 = scmp.lt.s32.totalorder %s14, 1
      %s159 = scalar_select %p158, %s14, 1
      %s160 = smul.addr %s159, 4
      %s161 = scalar_lea.vmem %s0, %s160
      %p162 = scmp.lt.s32.totalorder %s14, 1
      %s163 = scalar_select %p162, %s14, 1
      %s164 = smul.addr %s163, 8
      %s165 = scalar_lea.vmem %s3, %s164
      %v167 = vld [vmem:[%s161] sm:$0xf]
      %v168 = vld [vmem:[%s1] sm:$0xf]
      %v169 = vld [vmem:[%s1 + $0x4] sm:$0xf]
      %v170 = vld [vmem:[%s1 + $0x8] sm:$0xf]
      %v171 = vld [vmem:[%s1 + $0xc] sm:$0xf]
      %v172 = vld [vmem:[%s2] sm:$0x1]
      %v174 = vperm.slane %v172, 0
      %v180 = vunpack.c.l.b16 %v168
      %v181 = vunpack.c.l.b16 %v169
      %v182 = vunpack.c.l.b16 %v170
      %v183 = vunpack.c.l.b16 %v171
      %v184 = vpack.c.b16 %v181, %v180
      %v185 = vpack.c.b16 %v183, %v182
      %vm188 = vcmask 261120
      %v190 = vsel %vm188, %v167, 0
      %192 = vmatpush.bf16.msra.mxu0 0
      %193 = vmatpush.bf16.msra.mxu0 0
      %194 = vmatpush.bf16.msra.mxu0 0
      %195 = vmatpush.bf16.msra.mxu0 0
      %196 = vmatpush.bf16.msra.mxu0 0
      %197 = vmatpush.bf16.msra.mxu0 0
      %198 = vmatpush.bf16.msra.mxu0 %v185
      %199 = vmatpush.bf16.msra.mxu0 %v184
      %200 = vmatmul.bf16.gmra.mxu0 %v190
      %v201 = vpop.f32.mrf.mxu0
      %v202 = vadd.f32 %v174, %v201
      %v203 = vpop.f32.mrf.mxu0
      %204 = vdwg.mxu0
      %205 = vst.msk [vmem:[%s165] sm:$0xff] %vm188, %v202
      %p206 = scmp.lt.s32.totalorder %s14, 1
      %s207 = scalar_select %p206, %s14, 1
      %s208 = smul.addr %s207, 8
      %s209 = scalar_lea.vmem %s3, %s208
      // Predicated region
      $region33: #{linear_control_forward.2} parent=31 // pred_check
        %p210 = pneg %p100
      $region34: #{linear_control_forward.2} parent=31 // pred_check_branch
        %212 = sbr.rel (%p210) target = $region36
      $region35: #{linear_control_forward.2} parent=31 // pred_region
        _
      $region36: #{linear_control_forward.2} parent=31 // pred_fallthru
        _
    $region32: #{linear_control_forward.2} parent=5 // pred_fallthru
      _
    %p213 = scmp.le.s32.totalorder 2, %s9
    // Predicated region
    $region37: #{linear_control_forward.2} parent=5 // pred_check
      %p214 = pneg %p213
    $region38: #{linear_control_forward.2} parent=5 // pred_check_branch
      %216 = sbr.rel (%p214) target = $region40
    $region39: #{linear_control_forward.2} parent=5 // pred_region
      %s217 = ssub.s32 %s9, 2
      // Predicated region
      $region41: #{linear_control_forward.2} parent=39 // pred_check
        %p218 = pneg %p106
      $region42: #{linear_control_forward.2} parent=39 // pred_check_branch
        %220 = sbr.rel (%p218) target = $region44
      $region43: #{linear_control_forward.2} parent=39 // pred_region
        %p221 = scmp.lt.s32.totalorder %s15, 1
        %s222 = scalar_select %p221, %s15, 1
        %s223 = smul.addr %s222, 8
        %s224 = scalar_lea.vmem %s3, %s223
      $region44: #{linear_control_forward.2} parent=39 // pred_fallthru
        _
    $region40: #{linear_control_forward.2} parent=5 // pred_fallthru
      _
  $region6: #{linear_control_forward.2} parent=0 // loop_footer
    %s13 = sadd.s32 1, %s9
  $region7: #{linear_control_forward.2} parent=0 // loop_footer_branch
    %8 = sbr.rel target = $region3
  $region8: #{linear_control_forward.2} parent=0 // loop_exit
    _

// kernel: linear_control_forward.3
$region0: #{linear_control_forward.3}
  #allocation0 [shape = 'u32[]', space=smem, size = 0x4, offset = 0x4, fixed_abs, tag = 'smem constant byte address 0x4 - core index']
  #allocation1 [shape = 'u32[72,128]{1,0:T(1,128)}', space=vmem, size = 0x9000, scoped, tag = 'internal scratch']
  #allocation2 [shape = 'f32[2,32]{1,0:T(2,128)}', space=vmem, size = 0x400, scoped, tag = 'scratch operand']
  #allocation3 [shape = 's32[2]{0}', space=sflag, size = 0x8, scoped, tag = 'scratch operand']
  #allocation6 [shape = 's32[]', space=sflag, size = 0x4, offset = 0, fixed_abs, tag = 'sflag constant byte address 0x0 - dummy sync flag']
  #allocation7 [shape = 's32[]', space=sflag, size = 0x4, offset = 0, fixed_abs, tag = 'sflag constant byte address 0x0 - dummy sync flag']
  #allocation8 [shape = 's32[]', space=sflag, size = 0x4, offset = 0, fixed_abs, tag = 'sflag constant byte address 0x0 - dummy sync flag']
  #allocation9 [shape = 's32[]', space=sflag, size = 0x4, offset = 0, fixed_abs, tag = 'sflag constant byte address 0x0 - dummy sync flag']
  %s0 = inlined_call_operand.vmem [shape: f32[16,32], index: 0, kind: input, shape index: {}, may-alias: {0,3}]
  %s1 = inlined_call_operand.vmem [shape: f32[1,32], index: 1, kind: input, shape index: {}]
  %s2 = inlined_call_operand.vmem [shape: f32[2], index: 2, kind: input, shape index: {}]
  %s3 = inlined_call_operand.vmem [shape: f32[16,32], index: 3, kind: output, shape index: {0}, may-alias: {0,3}]
  %s4 = inlined_call_operand.vmem [shape: f32[2,1], index: 4, kind: output, shape index: {1}]
  %s5 = inlined_call_operand.vmem [shape: f32[2,1], index: 5, kind: output, shape index: {2}]
  %6 = xla_tuple %s3, %s4, %s5
  %s7 = sld [smem:[#allocation0]]
  $region150: #{linear_control_forward.3} parent=0
    _
  %s9 = ssub.s32 1, %s7
  %s10 = scalar_select 0, %s9, %s7
  $region1: #{linear_control_forward.3} parent=0
    #allocation4 [shape = 'u8[512]{0}', space=smem, size = 0x200, scoped, tag = 'input window, operand 2, single buffered']
    #allocation5 [shape = 's32[1]{0}', space=sflag, size = 0x4, scoped, tag = 'scoped memory for linear_control_forward.3']
    %11 = vsyncpa [#allocation5], 0
    // Predicated region
    $region2: #{linear_control_forward.3} parent=1 // pred_check
      _
    $region3: #{linear_control_forward.3} parent=1 // pred_check_branch
      %13 = sbr.rel (0) target = $region5
    $region4: #{linear_control_forward.3} parent=1 // pred_region
      _
    $region5: #{linear_control_forward.3} parent=1 // pred_fallthru
      _
    // Predicated region
    $region6: #{linear_control_forward.3} parent=1 // pred_check
      _
    $region7: #{linear_control_forward.3} parent=1 // pred_check_branch
      %15 = sbr.rel (0) target = $region9
    $region8: #{linear_control_forward.3} parent=1 // pred_region
      %17 = vsyncadd [#allocation5], 0
      %s19 = sshll.u32 %s2, 4
      %s20 = int_to_ptr.vmem [resolvable:$true] %s19
      %22 = dma.vmem_to_smem %s20, 16, [#allocation4], [#allocation5]
    $region9: #{linear_control_forward.3} parent=1 // pred_fallthru
      _
    // Predicated region
    $region10: #{linear_control_forward.3} parent=1 // pred_check
      _
    $region11: #{linear_control_forward.3} parent=1 // pred_check_branch
      %24 = sbr.rel (0) target = $region13
    $region12: #{linear_control_forward.3} parent=1 // pred_region
      %26 = dma.done [#allocation5], 16
    $region13: #{linear_control_forward.3} parent=1 // pred_fallthru
      _
    %27 = sfence
    %s28 = scalar_lea.vmem %s0, 7
    // Predicated region
    $region14: #{linear_control_forward.3} parent=1 // pred_check
      _
    $region15: #{linear_control_forward.3} parent=1 // pred_check_branch
      %30 = sbr.rel target = $region17
    $region16: #{linear_control_forward.3} parent=1 // pred_region
      // Predicated region
      $region29: #{linear_control_forward.3} parent=16 // pred_check
        _
      $region30: #{linear_control_forward.3} parent=16 // pred_check_branch
        %46 = sbr.rel (0) target = $region32
      $region31: #{linear_control_forward.3} parent=16 // pred_region
        %s48 = ssub.s32 2, 1
        loop: start=0, step=1, limit=1
        $region33: #{linear_control_forward.3} parent=31 // loop_pre_header
          _
        $region34: #{linear_control_forward.3} parent=31 // loop_header
          %s50 = sphi 0, %s54
          %p51 = scmp.ge.s32.totalorder %s50, 1
          %s55 = sphi %s28, %s28
          %s56 = sphi [#allocation2], [#allocation2]
        $region35: #{linear_control_forward.3} parent=31 // loop_header_branch
          %53 = sbr.rel (%p51) target = $region39
        $region36: #{linear_control_forward.3} parent=31 // loop_body
          %v57 = vld [vmem:[%s55] sm:%s48]
          %58 = vst [vmem:[%s56] sm:%s48] %v57
        $region37: #{linear_control_forward.3} parent=31 // loop_footer
          %s54 = sadd.s32 1, %s50
        $region38: #{linear_control_forward.3} parent=31 // loop_footer_branch
          %49 = sbr.rel target = $region34
        $region39: #{linear_control_forward.3} parent=31 // loop_exit
          _
      $region32: #{linear_control_forward.3} parent=16 // pred_fallthru
        _
    $region17: #{linear_control_forward.3} parent=1 // pred_fallthru
      _
    // Predicated region
    $region18: #{linear_control_forward.3} parent=1 // pred_check
      _
    $region19: #{linear_control_forward.3} parent=1 // pred_check_branch
      %32 = sbr.rel (0) target = $region21
    $region20: #{linear_control_forward.3} parent=1 // pred_region
      %s34 = ssub.s32 2, 1
      loop: start=0, step=1, limit=1
      $region22: #{linear_control_forward.3} parent=20 // loop_pre_header
        _
      $region23: #{linear_control_forward.3} parent=20 // loop_header
        %s36 = sphi 0, %s40
        %p37 = scmp.ge.s32.totalorder %s36, 1
        %s41 = sphi %s28, %s28
        %s42 = sphi [#allocation2], [#allocation2]
      $region24: #{linear_control_forward.3} parent=20 // loop_header_branch
        %39 = sbr.rel (%p37) target = $region28
      $region25: #{linear_control_forward.3} parent=20 // loop_body
        %v43 = vld [vmem:[%s41] sm:%s34]
        %44 = vst [vmem:[%s42] sm:%s34] %v43
      $region26: #{linear_control_forward.3} parent=20 // loop_footer
        %s40 = sadd.s32 1, %s36
      $region27: #{linear_control_forward.3} parent=20 // loop_footer_branch
        %35 = sbr.rel target = $region23
      $region28: #{linear_control_forward.3} parent=20 // loop_exit
        _
    $region21: #{linear_control_forward.3} parent=1 // pred_fallthru
      _
    // Predicated region
    $region40: #{linear_control_forward.3} parent=1 // pred_check
      _
    $region41: #{linear_control_forward.3} parent=1 // pred_check_branch
      %61 = sbr.rel (0) target = $region43
    $region42: #{linear_control_forward.3} parent=1 // pred_region
      %62 = vsyncadd [#allocation3], 16
    $region43: #{linear_control_forward.3} parent=1 // pred_fallthru
      _
    %s63 = scalar_lea.vmem %s0, 15
    %s64 = scalar_lea.vmem [#allocation2], 1
    %s65 = scalar_lea.sflag [#allocation3], 1
    // Predicated region
    $region44: #{linear_control_forward.3} parent=1 // pred_check
      _
    $region45: #{linear_control_forward.3} parent=1 // pred_check_branch
      %67 = sbr.rel target = $region47
    $region46: #{linear_control_forward.3} parent=1 // pred_region
      // Predicated region
      $region59: #{linear_control_forward.3} parent=46 // pred_check
        _
      $region60: #{linear_control_forward.3} parent=46 // pred_check_branch
        %83 = sbr.rel (0) target = $region62
      $region61: #{linear_control_forward.3} parent=46 // pred_region
        %s85 = ssub.s32 2, 1
        loop: start=0, step=1, limit=1
        $region63: #{linear_control_forward.3} parent=61 // loop_pre_header
          _
        $region64: #{linear_control_forward.3} parent=61 // loop_header
          %s87 = sphi 0, %s91
          %p88 = scmp.ge.s32.totalorder %s87, 1
          %s92 = sphi %s63, %s63
          %s93 = sphi %s64, %s64
        $region65: #{linear_control_forward.3} parent=61 // loop_header_branch
          %90 = sbr.rel (%p88) target = $region69
        $region66: #{linear_control_forward.3} parent=61 // loop_body
          %v94 = vld [vmem:[%s92] sm:%s85]
          %95 = vst [vmem:[%s93] sm:%s85] %v94
        $region67: #{linear_control_forward.3} parent=61 // loop_footer
          %s91 = sadd.s32 1, %s87
        $region68: #{linear_control_forward.3} parent=61 // loop_footer_branch
          %86 = sbr.rel target = $region64
        $region69: #{linear_control_forward.3} parent=61 // loop_exit
          _
      $region62: #{linear_control_forward.3} parent=46 // pred_fallthru
        _
    $region47: #{linear_control_forward.3} parent=1 // pred_fallthru
      _
    // Predicated region
    $region48: #{linear_control_forward.3} parent=1 // pred_check
      _
    $region49: #{linear_control_forward.3} parent=1 // pred_check_branch
      %69 = sbr.rel (0) target = $region51
    $region50: #{linear_control_forward.3} parent=1 // pred_region
      %s71 = ssub.s32 2, 1
      loop: start=0, step=1, limit=1
      $region52: #{linear_control_forward.3} parent=50 // loop_pre_header
        _
      $region53: #{linear_control_forward.3} parent=50 // loop_header
        %s73 = sphi 0, %s77
        %p74 = scmp.ge.s32.totalorder %s73, 1
        %s78 = sphi %s63, %s63
        %s79 = sphi %s64, %s64
      $region54: #{linear_control_forward.3} parent=50 // loop_header_branch
        %76 = sbr.rel (%p74) target = $region58
      $region55: #{linear_control_forward.3} parent=50 // loop_body
        %v80 = vld [vmem:[%s78] sm:%s71]
        %81 = vst [vmem:[%s79] sm:%s71] %v80
      $region56: #{linear_control_forward.3} parent=50 // loop_footer
        %s77 = sadd.s32 1, %s73
      $region57: #{linear_control_forward.3} parent=50 // loop_footer_branch
        %72 = sbr.rel target = $region53
      $region58: #{linear_control_forward.3} parent=50 // loop_exit
        _
    $region51: #{linear_control_forward.3} parent=1 // pred_fallthru
      _
    // Predicated region
    $region70: #{linear_control_forward.3} parent=1 // pred_check
      _
    $region71: #{linear_control_forward.3} parent=1 // pred_check_branch
      %98 = sbr.rel (0) target = $region73
    $region72: #{linear_control_forward.3} parent=1 // pred_region
      %99 = vsyncadd %s65, 16
    $region73: #{linear_control_forward.3} parent=1 // pred_fallthru
      _
    %s100 = smul.u32 1, 1
    %s101 = sshll.u32 %s100, 4
    %102 = dma.done [#allocation3], %s101
    %s103 = sshll.u32 %s100, 4
    %104 = dma.done %s65, %s103
    %v105 = vld [vmem:[#allocation2] sm:$0x3]
    %v106 = vld [vmem:[%s1] sm:$0x1]
    %s107 = sld [smem:[#allocation4]]
    %s108 = sld [smem:[#allocation4 + $0x1]]
    %v110 = vperm.slane %v106, 0
    %v112 = vmul.f32 %v105, %v110
    %vm113 = vcmask 254976
    %v114 = vsel %vm113, %v112, 0.0
    %115 = vadd.xlane.f32.xlu0 %v114
    %v116 = vpop.xlane.xlu0 %115
    %v117 = vstv %s108
    %v118 = vsub.f32 %v116, %v117
    %v119 = vmul.f32 %v118, 1.442695
    %v120 = vpow.pop %v119
    %v121 = vadd.f32 %v120, 1.0
    %v122 = vrcp.pop %v121
    %v123 = vmul.f32 %v121, %v122
    %v124 = vsub.f32 1.0, %v123
    %v125 = vmul.f32 %v122, %v124
    %v126 = vadd.f32 %v122, %v125
    %vm127 = vweird.f32 %v121
    %vm128 = vweird.f32 %v122
    %vm129 = vmor %vm127, %vm128
    %v130 = vsel %vm129, %v122, %v126
    %v131 = vand.u32 2147483647, %v121
    %vm132 = vcmp.eq.f32.partialorder %v131, 8.507059e+37
    %v133 = vand.u32 %v121, 2147483648
    %v134 = vor.u32 1.1754944e-38, %v133
    %v135 = vsel %vm132, %v134, %v130
    %v136 = vmul.f32 1.0, %v135
    %vm137 = vcmask 1024
    %138 = vst.msk [vmem:[%s4] sm:$0x3] %vm137, %v136
    %vm139 = vcmp.lt.f32.partialorder %v116, -0.05
    %v140 = vsel %vm139, %v116, 0.0
    %v141 = vmul.f32 %v140, 1.442695
    %v142 = vpow.pop %v141
    %v143 = vadd.f32 %v142, 1.0
    %v144 = vrcp.pop %v143
    %v145 = vmul.f32 %v143, %v144
    %v146 = vsub.f32 1.0, %v145
    %v147 = vmul.f32 %v144, %v146
    %v148 = vadd.f32 %v144, %v147
    %vm149 = vweird.f32 %v143
    %vm150 = vweird.f32 %v144
    %vm151 = vmor %vm149, %vm150
    %v152 = vsel %vm151, %v144, %v148
    %v153 = vand.u32 2147483647, %v143
    %vm154 = vcmp.eq.f32.partialorder %v153, 8.507059e+37
    %v155 = vand.u32 %v143, 2147483648
    %v156 = vor.u32 1.1754944e-38, %v155
    %v157 = vsel %vm154, %v156, %v152
    %v158 = vmul.f32 1.0, %v157
    %v159 = vstv %s107
    %v160 = vmul.f32 %v158, %v159
    %v161 = vadd.f32 %v160, %v140
    %v162 = vmin.f32 %v161, 60.0
    %v163 = vmul.f32 %v162, 1.442695
    %v164 = vpow.pop %v163
    %v165 = vmul.f32 %v158, %v164
    %v166 = vadd.f32 %v165, %v158
    %v167 = vsub.f32 %v166, 1.0
    %v168 = vadd.f32 %v160, 1.0
    %v169 = vmul.f32 %v164, %v168
    %v170 = vadd.f32 %v169, 1.0
    %v171 = vrcp.pop %v170
    %v172 = vmul.f32 %v170, %v171
    %v173 = vsub.f32 1.0, %v172
    %v174 = vmul.f32 %v171, %v173
    %v175 = vadd.f32 %v171, %v174
    %vm176 = vweird.f32 %v170
    %vm177 = vweird.f32 %v171
    %vm178 = vmor %vm176, %vm177
    %v179 = vsel %vm178, %v171, %v175
    %v180 = vand.u32 2147483647, %v170
    %vm181 = vcmp.eq.f32.partialorder %v180, 8.507059e+37
    %v182 = vand.u32 %v170, 2147483648
    %v183 = vor.u32 1.1754944e-38, %v182
    %v184 = vsel %vm181, %v183, %v179
    %v185 = vmul.f32 %v167, %v184
    %v186 = vsub.f32 %v158, %v185
    %v187 = vmax.f32 %v186, 1e-08
    %v188 = vmin.f32 %v187, 1.0
    %v189 = vmul.f32 %v188, %v159
    %v190 = vadd.f32 %v189, %v140
    %v191 = vmin.f32 %v190, 60.0
    %v192 = vmul.f32 %v191, 1.442695
    %v193 = vpow.pop %v192
    %v194 = vmul.f32 %v188, %v193
    %v195 = vadd.f32 %v194, %v188
    %v196 = vsub.f32 %v195, 1.0
    %v197 = vadd.f32 %v189, 1.0
    %v198 = vmul.f32 %v193, %v197
    %v199 = vadd.f32 %v198, 1.0
    %v200 = vrcp.pop %v199
    %v201 = vmul.f32 %v199, %v200
    %v202 = vsub.f32 1.0, %v201
    %v203 = vmul.f32 %v200, %v202
    %v204 = vadd.f32 %v200, %v203
    %vm205 = vweird.f32 %v199
    %vm206 = vweird.f32 %v200
    %vm207 = vmor %vm205, %vm206
    %v208 = vsel %vm207, %v200, %v204
    %v209 = vand.u32 2147483647, %v199
    %vm210 = vcmp.eq.f32.partialorder %v209, 8.507059e+37
    %v211 = vand.u32 %v199, 2147483648
    %v212 = vor.u32 1.1754944e-38, %v211
    %v213 = vsel %vm210, %v212, %v208
    %v214 = vmul.f32 %v196, %v213
    %v215 = vsub.f32 %v188, %v214
    %v216 = vmax.f32 %v215, 1e-08
    %v217 = vmin.f32 %v216, 1.0
    %v218 = vmul.f32 %v217, %v159
    %v219 = vadd.f32 %v218, %v140
    %v220 = vmin.f32 %v219, 60.0
    %v221 = vmul.f32 %v220, 1.442695
    %v222 = vpow.pop %v221
    %v223 = vmul.f32 %v217, %v222
    %v224 = vadd.f32 %v223, %v217
    %v225 = vsub.f32 %v224, 1.0
    %v226 = vadd.f32 %v218, 1.0
    %v227 = vmul.f32 %v222, %v226
    %v228 = vadd.f32 %v227, 1.0
    %v229 = vrcp.pop %v228
    %v230 = vmul.f32 %v228, %v229
    %v231 = vsub.f32 1.0, %v230
    %v232 = vmul.f32 %v229, %v231
    %v233 = vadd.f32 %v229, %v232
    %vm234 = vweird.f32 %v228
    %vm235 = vweird.f32 %v229
    %vm236 = vmor %vm234, %vm235
    %v237 = vsel %vm236, %v229, %v233
    %v238 = vand.u32 2147483647, %v228
    %vm239 = vcmp.eq.f32.partialorder %v238, 8.507059e+37
    %v240 = vand.u32 %v228, 2147483648
    %v241 = vor.u32 1.1754944e-38, %v240
    %v242 = vsel %vm239, %v241, %v237
    %v243 = vmul.f32 %v225, %v242
    %v244 = vsub.f32 %v217, %v243
    %v245 = vmax.f32 %v244, 1e-08
    %v246 = vmin.f32 %v245, 1.0
    %v247 = vmul.f32 %v246, %v159
    %v248 = vadd.f32 %v247, %v140
    %v249 = vmin.f32 %v248, 60.0
    %v250 = vmul.f32 %v249, 1.442695
    %v251 = vpow.pop %v250
    %v252 = vmul.f32 %v246, %v251
    %v253 = vadd.f32 %v252, %v246
    %v254 = vsub.f32 %v253, 1.0
    %v255 = vadd.f32 %v247, 1.0
    %v256 = vmul.f32 %v251, %v255
    %v257 = vadd.f32 %v256, 1.0
    %v258 = vrcp.pop %v257
    %v259 = vmul.f32 %v257, %v258
    %v260 = vsub.f32 1.0, %v259
    %v261 = vmul.f32 %v258, %v260
    %v262 = vadd.f32 %v258, %v261
    %vm263 = vweird.f32 %v257
    %vm264 = vweird.f32 %v258
    %vm265 = vmor %vm263, %vm264
    %v266 = vsel %vm265, %v258, %v262
    %v267 = vand.u32 2147483647, %v257
    %vm268 = vcmp.eq.f32.partialorder %v267, 8.507059e+37
    %v269 = vand.u32 %v257, 2147483648
    %v270 = vor.u32 1.1754944e-38, %v269
    %v271 = vsel %vm268, %v270, %v266
    %v272 = vmul.f32 %v254, %v271
    %v273 = vsub.f32 %v246, %v272
    %v274 = vmax.f32 %v273, 1e-08
    %v275 = vmin.f32 %v274, 1.0
    %v276 = vmul.f32 %v275, %v159
    %v277 = vadd.f32 %v276, %v140
    %v278 = vmin.f32 %v277, 60.0
    %v279 = vmul.f32 %v278, 1.442695
    %v280 = vpow.pop %v279
    %v281 = vmul.f32 %v275, %v280
    %v282 = vadd.f32 %v281, %v275
    %v283 = vsub.f32 %v282, 1.0
    %v284 = vadd.f32 %v276, 1.0
    %v285 = vmul.f32 %v280, %v284
    %v286 = vadd.f32 %v285, 1.0
    %v287 = vrcp.pop %v286
    %v288 = vmul.f32 %v286, %v287
    %v289 = vsub.f32 1.0, %v288
    %v290 = vmul.f32 %v287, %v289
    %v291 = vadd.f32 %v287, %v290
    %vm292 = vweird.f32 %v286
    %vm293 = vweird.f32 %v287
    %vm294 = vmor %vm292, %vm293
    %v295 = vsel %vm294, %v287, %v291
    %v296 = vand.u32 2147483647, %v286
    %vm297 = vcmp.eq.f32.partialorder %v296, 8.507059e+37
    %v298 = vand.u32 %v286, 2147483648
    %v299 = vor.u32 1.1754944e-38, %v298
    %v300 = vsel %vm297, %v299, %v295
    %v301 = vmul.f32 %v283, %v300
    %v302 = vsub.f32 %v275, %v301
    %v303 = vmax.f32 %v302, 1e-08
    %v304 = vmin.f32 %v303, 1.0
    %v305 = vsel %vm139, %v304, 0.0
    %v306 = vmul.f32 %v305, 0.01
    %v307 = vmul.f32 %v306, %v110
    %v308 = vadd.f32 %v105, %v307
    %v309 = vmul.f32 %v306, %v159
    %v310 = vadd.f32 %v116, %v309
    %v311 = vsub.f32 %v310, %v117
    %v312 = vmul.f32 %v311, 1.442695
    %v313 = vpow.pop %v312
    %v314 = vadd.f32 %v313, 1.0
    %v315 = vrcp.pop %v314
    %v316 = vmul.f32 %v314, %v315
    %v317 = vsub.f32 1.0, %v316
    %v318 = vmul.f32 %v315, %v317
    %v319 = vadd.f32 %v315, %v318
    %vm320 = vweird.f32 %v314
    %vm321 = vweird.f32 %v315
    %vm322 = vmor %vm320, %vm321
    %v323 = vsel %vm322, %v315, %v319
    %v324 = vand.u32 2147483647, %v314
    %vm325 = vcmp.eq.f32.partialorder %v324, 8.507059e+37
    %v326 = vand.u32 %v314, 2147483648
    %v327 = vor.u32 1.1754944e-38, %v326
    %v328 = vsel %vm325, %v327, %v323
    %v329 = vmul.f32 1.0, %v328
    %330 = vst.msk [vmem:[%s5] sm:$0x3] %vm137, %v329
    %331 = vst.msk [vmem:[#allocation2] sm:$0x3] %vm113, %v308
    %s332 = scalar_lea.vmem %s3, 7
    // Predicated region
    $region74: #{linear_control_forward.3} parent=1 // pred_check
      _
    $region75: #{linear_control_forward.3} parent=1 // pred_check_branch
      %334 = sbr.rel target = $region77
    $region76: #{linear_control_forward.3} parent=1 // pred_region
      // Predicated region
      $region89: #{linear_control_forward.3} parent=76 // pred_check
        _
      $region90: #{linear_control_forward.3} parent=76 // pred_check_branch
        %350 = sbr.rel (0) target = $region92
      $region91: #{linear_control_forward.3} parent=76 // pred_region
        %s352 = ssub.s32 2, 1
        loop: start=0, step=1, limit=1
        $region93: #{linear_control_forward.3} parent=91 // loop_pre_header
          _
        $region94: #{linear_control_forward.3} parent=91 // loop_header
          %s354 = sphi 0, %s358
          %p355 = scmp.ge.s32.totalorder %s354, 1
          %s359 = sphi [#allocation2], [#allocation2]
          %s360 = sphi %s332, %s332
        $region95: #{linear_control_forward.3} parent=91 // loop_header_branch
          %357 = sbr.rel (%p355) target = $region99
        $region96: #{linear_control_forward.3} parent=91 // loop_body
          %v361 = vld [vmem:[%s359] sm:%s352]
          %362 = vst [vmem:[%s360] sm:%s352] %v361
        $region97: #{linear_control_forward.3} parent=91 // loop_footer
          %s358 = sadd.s32 1, %s354
        $region98: #{linear_control_forward.3} parent=91 // loop_footer_branch
          %353 = sbr.rel target = $region94
        $region99: #{linear_control_forward.3} parent=91 // loop_exit
          _
      $region92: #{linear_control_forward.3} parent=76 // pred_fallthru
        _
    $region77: #{linear_control_forward.3} parent=1 // pred_fallthru
      _
    // Predicated region
    $region78: #{linear_control_forward.3} parent=1 // pred_check
      _
    $region79: #{linear_control_forward.3} parent=1 // pred_check_branch
      %336 = sbr.rel (0) target = $region81
    $region80: #{linear_control_forward.3} parent=1 // pred_region
      %s338 = ssub.s32 2, 1
      loop: start=0, step=1, limit=1
      $region82: #{linear_control_forward.3} parent=80 // loop_pre_header
        _
      $region83: #{linear_control_forward.3} parent=80 // loop_header
        %s340 = sphi 0, %s344
        %p341 = scmp.ge.s32.totalorder %s340, 1
        %s345 = sphi [#allocation2], [#allocation2]
        %s346 = sphi %s332, %s332
      $region84: #{linear_control_forward.3} parent=80 // loop_header_branch
        %343 = sbr.rel (%p341) target = $region88
      $region85: #{linear_control_forward.3} parent=80 // loop_body
        %v347 = vld [vmem:[%s345] sm:%s338]
        %348 = vst [vmem:[%s346] sm:%s338] %v347
      $region86: #{linear_control_forward.3} parent=80 // loop_footer
        %s344 = sadd.s32 1, %s340
      $region87: #{linear_control_forward.3} parent=80 // loop_footer_branch
        %339 = sbr.rel target = $region83
      $region88: #{linear_control_forward.3} parent=80 // loop_exit
        _
    $region81: #{linear_control_forward.3} parent=1 // pred_fallthru
      _
    // Predicated region
    $region100: #{linear_control_forward.3} parent=1 // pred_check
      _
    $region101: #{linear_control_forward.3} parent=1 // pred_check_branch
      %365 = sbr.rel (0) target = $region103
    $region102: #{linear_control_forward.3} parent=1 // pred_region
      %366 = vsyncadd [#allocation3], 16
    $region103: #{linear_control_forward.3} parent=1 // pred_fallthru
      _
    %s367 = scalar_lea.vmem %s3, 15
    // Predicated region
    $region104: #{linear_control_forward.3} parent=1 // pred_check
      _
    $region105: #{linear_control_forward.3} parent=1 // pred_check_branch
      %369 = sbr.rel target = $region107
    $region106: #{linear_control_forward.3} parent=1 // pred_region
      // Predicated region
      $region119: #{linear_control_forward.3} parent=106 // pred_check
        _
      $region120: #{linear_control_forward.3} parent=106 // pred_check_branch
        %385 = sbr.rel (0) target = $region122
      $region121: #{linear_control_forward.3} parent=106 // pred_region
        %s387 = ssub.s32 2, 1
        loop: start=0, step=1, limit=1
        $region123: #{linear_control_forward.3} parent=121 // loop_pre_header
          _
        $region124: #{linear_control_forward.3} parent=121 // loop_header
          %s389 = sphi 0, %s393
          %p390 = scmp.ge.s32.totalorder %s389, 1
          %s394 = sphi %s64, %s64
          %s395 = sphi %s367, %s367
        $region125: #{linear_control_forward.3} parent=121 // loop_header_branch
          %392 = sbr.rel (%p390) target = $region129
        $region126: #{linear_control_forward.3} parent=121 // loop_body
          %v396 = vld [vmem:[%s394] sm:%s387]
          %397 = vst [vmem:[%s395] sm:%s387] %v396
        $region127: #{linear_control_forward.3} parent=121 // loop_footer
          %s393 = sadd.s32 1, %s389
        $region128: #{linear_control_forward.3} parent=121 // loop_footer_branch
          %388 = sbr.rel target = $region124
        $region129: #{linear_control_forward.3} parent=121 // loop_exit
          _
      $region122: #{linear_control_forward.3} parent=106 // pred_fallthru
        _
    $region107: #{linear_control_forward.3} parent=1 // pred_fallthru
      _
    // Predicated region
    $region108: #{linear_control_forward.3} parent=1 // pred_check
      _
    $region109: #{linear_control_forward.3} parent=1 // pred_check_branch
      %371 = sbr.rel (0) target = $region111
    $region110: #{linear_control_forward.3} parent=1 // pred_region
      %s373 = ssub.s32 2, 1
      loop: start=0, step=1, limit=1
      $region112: #{linear_control_forward.3} parent=110 // loop_pre_header
        _
      $region113: #{linear_control_forward.3} parent=110 // loop_header
        %s375 = sphi 0, %s379
        %p376 = scmp.ge.s32.totalorder %s375, 1
        %s380 = sphi %s64, %s64
        %s381 = sphi %s367, %s367
      $region114: #{linear_control_forward.3} parent=110 // loop_header_branch
        %378 = sbr.rel (%p376) target = $region118
      $region115: #{linear_control_forward.3} parent=110 // loop_body
        %v382 = vld [vmem:[%s380] sm:%s373]
        %383 = vst [vmem:[%s381] sm:%s373] %v382
      $region116: #{linear_control_forward.3} parent=110 // loop_footer
        %s379 = sadd.s32 1, %s375
      $region117: #{linear_control_forward.3} parent=110 // loop_footer_branch
        %374 = sbr.rel target = $region113
      $region118: #{linear_control_forward.3} parent=110 // loop_exit
        _
    $region111: #{linear_control_forward.3} parent=1 // pred_fallthru
      _
    // Predicated region
    $region130: #{linear_control_forward.3} parent=1 // pred_check
      _
    $region131: #{linear_control_forward.3} parent=1 // pred_check_branch
      %400 = sbr.rel (0) target = $region133
    $region132: #{linear_control_forward.3} parent=1 // pred_region
      %401 = vsyncadd %s65, 16
    $region133: #{linear_control_forward.3} parent=1 // pred_fallthru
      _
    %s402 = sshll.u32 %s100, 4
    %403 = dma.done [#allocation3], %s402
    %s404 = sshll.u32 %s100, 4
    %405 = dma.done %s65, %s404
    // Predicated region
    $region134: #{linear_control_forward.3} parent=1 // pred_check
      _
    $region135: #{linear_control_forward.3} parent=1 // pred_check_branch
      %407 = sbr.rel (0) target = $region137
    $region136: #{linear_control_forward.3} parent=1 // pred_region
      _
    $region137: #{linear_control_forward.3} parent=1 // pred_fallthru
      _
    // Predicated region
    $region138: #{linear_control_forward.3} parent=1 // pred_check
      _
    $region139: #{linear_control_forward.3} parent=1 // pred_check_branch
      %409 = sbr.rel (0) target = $region141
    $region140: #{linear_control_forward.3} parent=1 // pred_region
      _
    $region141: #{linear_control_forward.3} parent=1 // pred_fallthru
      _
    // Predicated region
    $region142: #{linear_control_forward.3} parent=1 // pred_check
      _
    $region143: #{linear_control_forward.3} parent=1 // pred_check_branch
      %411 = sbr.rel (0) target = $region145
    $region144: #{linear_control_forward.3} parent=1 // pred_region
      _
    $region145: #{linear_control_forward.3} parent=1 // pred_fallthru
      _
    // Predicated region
    $region146: #{linear_control_forward.3} parent=1 // pred_check
      _
    $region147: #{linear_control_forward.3} parent=1 // pred_check_branch
      %413 = sbr.rel (0) target = $region149
    $region148: #{linear_control_forward.3} parent=1 // pred_region
      _
    $region149: #{linear_control_forward.3} parent=1 // pred_fallthru
      _
    %414 = vsyncpa [#allocation5], 1
  %415 = vsyncmov [#allocation3]
  %s416 = vpop.sfrf %415
  %p417 = scmp.eq.s32.totalorder %s416, 0
  %p418 = pneg %p417
  %420 = shalt.err (%p418)
  %s421 = scalar_lea.sflag [#allocation3], 1
  %422 = vsyncmov %s421
  %s423 = vpop.sfrf %422
  %p424 = scmp.eq.s32.totalorder %s423, 0
  %p425 = pneg %p424
  %427 = shalt.err (%p425)

</llo_original>
